<compile_context>
chip_gen: v7x
topology: tpu7x:2x2x1
jax: 0.10.0
libtpu: 0.0.40
codegen_flags: <defaults>
</compile_context>

<pallas_src>
import jax
import jax.numpy as jnp
from jax.experimental import pallas as pl
from jax.experimental.pallas import tpu as pltpu

_LANE = 128


def _sublane_quantum(dtype):
    itemsize = jnp.dtype(dtype).itemsize
    return {4: 8, 2: 16, 1: 32}.get(itemsize, 8)


def _neg_fill(dtype):
    dtype = jnp.dtype(dtype)
    if jnp.issubdtype(dtype, jnp.floating):
        return float("-inf")
    if jnp.issubdtype(dtype, jnp.integer):
        return int(jnp.iinfo(dtype).min)
    if dtype == jnp.bool_:
        return False
    raise NotImplementedError(f"unsupported dtype for max readout: {dtype}")


def _vmem_limit_bytes():
    """Conservative scoped-VMEM limit: 3/4 of physical VMEM, capped at 96 MiB."""
    phys = 64 << 20  # safe default (v7x per-TensorCore VMEM)
    try:
        info = pltpu.get_tpu_info()
        phys = int(getattr(info, "vmem_capacity_bytes", phys)) or phys
    except Exception:
        pass
    return min((phys * 3) // 4, 96 << 20)


def _build_kernel(n_valid, tn, mask_tail, fill_value):
    def kernel(seq_ref, out_ref):
        # seq_ref: (B, tn, td)   out_ref: (B, td), resident across N-tiles.
        n = pl.program_id(1)
        x = seq_ref[...]
        if mask_tail:
            node = n * tn + jax.lax.broadcasted_iota(jnp.int32, x.shape, 1)
            x = jnp.where(node < n_valid, x, jnp.asarray(fill_value, x.dtype))
        blk = jnp.max(x, axis=1)

        @pl.when(n == 0)
        def _init():
            out_ref[...] = blk

        @pl.when(n != 0)
        def _acc():
            out_ref[...] = jnp.maximum(out_ref[...], blk)

    return kernel


def max_readout(seq):
    """Pallas equivalent of torch.max(seq, 1).values for seq of shape (B, N, D)."""
    B, N, D = seq.shape
    dtype = seq.dtype
    itemsize = jnp.dtype(dtype).itemsize

    # --- Lane folding for narrow feature dims: pack k nodes per row so the
    # vregs and the output store are lane-dense (128-wide).
    fold = 1
    if D < _LANE and _LANE % D == 0:
        k = _LANE // D
        if N % k == 0 and N >= k:
            fold = k
    # TODO(synk): D < 128 with 128 % D != 0 falls back to lane-masked stores.
    x = seq if fold == 1 else seq.reshape(B, N // fold, fold * D)
    Bw, Nw, Dw = x.shape

    # --- VMEM-budget-aware tile selection.
    vmem_limit = _vmem_limit_bytes()
    # 2 input buffers + (double-buffered) resident output + compiler slack.
    per_buf = max(vmem_limit // 4, 1 << 20)
    q_sub = _sublane_quantum(dtype)

    # Feature tile: prefer the full, contiguous feature dim within budget.
    min_tn = min(Nw, q_sub)
    max_td = max(per_buf // max(Bw * min_tn * itemsize, 1), _LANE)
    if Dw <= max(max_td, _LANE):
        td = Dw
    else:
        td = min((max_td // _LANE) * _LANE, Dw)
    # Megacore (v7x): keep >=2 blocks on the parallel axis for big problems.
    if td == Dw and Dw % (2 * _LANE) == 0 and Bw * Nw * Dw * itemsize >= (8 << 20):
        td = Dw // 2

    # Node (reduction) tile: fill the remaining per-buffer budget.
    max_tn = per_buf // max(Bw * td * itemsize, 1)
    tn = (min(max_tn, Nw) // q_sub) * q_sub
    if tn <= 0:
        tn = min(Nw, q_sub)
    if tn >= Nw:
        tn = Nw

    grid = (pl.cdiv(Dw, td), pl.cdiv(Nw, tn))
    mask_tail = (Nw % tn) != 0
    kernel = _build_kernel(Nw, tn, mask_tail, _neg_fill(dtype))

    cost = pl.CostEstimate(
        flops=Bw * Nw * Dw,  # one compare per element
        transcendentals=0,
        bytes_accessed=(Bw * Nw * Dw + Bw * Dw) * itemsize,
    )

    out = pl.pallas_call(
        kernel,
        out_shape=jax.ShapeDtypeStruct((Bw, Dw), dtype),
        grid=grid,
        in_specs=[pl.BlockSpec((Bw, tn, td), lambda d, n: (0, n, d))],
        out_specs=pl.BlockSpec((Bw, td), lambda d, n: (0, d)),
        compiler_params=pltpu.CompilerParams(
            dimension_semantics=("parallel", "arbitrary"),
            vmem_limit_bytes=vmem_limit,
        ),
        cost_estimate=cost,
    )(x)

    if fold > 1:
        out = jnp.max(out.reshape(B, fold, D), axis=1)
    return out


def _reference_forward(seq):
    """Pure-JAX replica of the PyTorch module for a correctness check."""
    return jnp.max(seq, axis=1)


if __name__ == "__main__":
    B, N, D = 2, 8, 32  # batch, nodes (reduced axis), hidden features

    key = jax.random.PRNGKey(0)
    seq = jax.random.normal(key, (B, N, D), jnp.float32)

    out = max_readout(seq)
    jax.block_until_ready(out)

    ref = _reference_forward(seq)
    assert out.shape == (B, D)
    assert jnp.allclose(out, ref, atol=0.0, rtol=0.0)

    print("KERNEL_OK")
</pallas_src>

<mosaic_0001>
module attributes {stable_mosaic.version = 11 : i64} {
  func.func @kernel(%arg0: i32, %arg1: i32, %arg2: memref<2x2x128xf32, #tpu.memory_space<vmem>>, %arg3: memref<2x128xf32, #tpu.memory_space<vmem>>) attributes {dimension_semantics = [#tpu.dimension_semantics<parallel>, #tpu.dimension_semantics<arbitrary>], iteration_bounds = array<i64: 1, 1>, scalar_prefetch = 0 : i64, scratch_operands = 0 : i64, tpu.core_type = #tpu.core_type<tc>, window_params = [{transform_indices = @transform_0, window_bounds = array<i64: 2, 2, 128>}, {transform_indices = @transform_1, window_bounds = array<i64: 2, 128>}]} {
    %c0 = arith.constant 0 : index
    %c0_0 = arith.constant 0 : index
    %c0_1 = arith.constant 0 : index
    %0 = vector.load %arg2[%c0, %c0_0, %c0_1] : memref<2x2x128xf32, #tpu.memory_space<vmem>>, vector<2x2x128xf32>
    %cst = arith.constant dense<0xFF800000> : vector<2x128xf32>
    %1 = vector.multi_reduction <maximumf>, %0, %cst [1] : vector<2x2x128xf32> to vector<2x128xf32>
    %c0_i32 = arith.constant 0 : i32
    %2 = arith.cmpi eq, %arg1, %c0_i32 : i32
    %3 = arith.extui %2 : i1 to i32
    %c0_i32_2 = arith.constant 0 : i32
    %4 = arith.cmpi ne, %3, %c0_i32_2 : i32
    scf.if %4 {
      %c0_5 = arith.constant 0 : index
      %c0_6 = arith.constant 0 : index
      %8 = vector.load %arg3[%c0_5, %c0_6] : memref<2x128xf32, #tpu.memory_space<vmem>>, vector<2x128xf32>
      tpu.vector_store %arg3[%c0_5, %c0_6], %1 {strides = array<i32>} : memref<2x128xf32, #tpu.memory_space<vmem>>, vector<2x128xf32>,
    } else {
    }
    %c0_i32_3 = arith.constant 0 : i32
    %5 = arith.cmpi ne, %arg1, %c0_i32_3 : i32
    %6 = arith.extui %5 : i1 to i32
    %c0_i32_4 = arith.constant 0 : i32
    %7 = arith.cmpi ne, %6, %c0_i32_4 : i32
    scf.if %7 {
      %c0_5 = arith.constant 0 : index
      %c0_6 = arith.constant 0 : index
      %8 = vector.load %arg3[%c0_5, %c0_6] : memref<2x128xf32, #tpu.memory_space<vmem>>, vector<2x128xf32>
      %9 = arith.maximumf %8, %1 : vector<2x128xf32>
      %c0_7 = arith.constant 0 : index
      %c0_8 = arith.constant 0 : index
      %10 = vector.load %arg3[%c0_7, %c0_8] : memref<2x128xf32, #tpu.memory_space<vmem>>, vector<2x128xf32>
      tpu.vector_store %arg3[%c0_7, %c0_8], %9 {strides = array<i32>} : memref<2x128xf32, #tpu.memory_space<vmem>>, vector<2x128xf32>,
    } else {
    }
    return
  }
  func.func @transform_0(%arg0: i32, %arg1: i32) -> (i32, i32, i32) {
    %c0_i32 = arith.constant 0 : i32
    %c0_i32_0 = arith.constant 0 : i32
    return %c0_i32, %arg1, %arg0 : i32, i32, i32
  }
  func.func @transform_1(%arg0: i32, %arg1: i32) -> (i32, i32) {
    %c0_i32 = arith.constant 0 : i32
    %c0_i32_0 = arith.constant 0 : i32
    return %c0_i32, %arg0 : i32, i32
  }
}

</mosaic_0001>

<llo_original>
// kernel: tpu_custom_call.1
$region0: #{tpu_custom_call.1}
  #allocation0 [shape = 'u32[]', space=smem, size = 0x4, offset = 0x4, fixed_abs, tag = 'smem constant byte address 0x4 - core index']
  #allocation1 [shape = 'u32[144,128]{1,0:T(1,128)}', space=vmem, size = 0x12000, scoped, tag = 'internal scratch']
  %s0 = inlined_call_operand.hbm [shape: f32[2,2,128], index: 0, kind: input, shape index: {}]
  %s1 = inlined_call_operand.hbm [shape: f32[2,128], index: 1, kind: output, shape index: {}]
  %s2 = sld [smem:[#allocation0]]
  $region26: #{tpu_custom_call.1} parent=0
    _
  %s4 = ssub.s32 1, %s2
  %s5 = scalar_select 0, %s4, %s2
  $region1: #{tpu_custom_call.1} parent=0
    #allocation2 [shape = 'u8[2048]{0}', space=vmem, size = 0x800, scoped, tag = 'input window, operand 0, single buffered']
    #allocation3 [shape = 's32[1]{0}', space=sflag, size = 0x4, scoped, tag = 'scoped memory for tpu_custom_call.1']
    #allocation4 [shape = 's32[1]{0}', space=sflag, size = 0x4, scoped, tag = 'scoped memory for tpu_custom_call.1']
    #allocation5 [shape = 'u8[1024]{0}', space=vmem, size = 0x400, scoped, tag = 'output window, operand 0, single buffered']
    %6 = vsyncpa [#allocation3], 0
    %7 = vsyncpa [#allocation4], 0
    // Predicated region
    $region2: #{tpu_custom_call.1} parent=1 // pred_check
      _
    $region3: #{tpu_custom_call.1} parent=1 // pred_check_branch
      %9 = sbr.rel (0) target = $region5
    $region4: #{tpu_custom_call.1} parent=1 // pred_region
      %s11 = ssub.s32 64, 64
      %12 = vsyncadd [#allocation3], %s11
      %s13 = sshll.u32 [#allocation2], 4
      %s14 = int_to_ptr.vmem [resolvable:$true] %s13
      %19 = dma.hbm_to_vmem [thread:$0]  %s0, 64, %s14, [#allocation3], 32, 32, 2
    $region5: #{tpu_custom_call.1} parent=1 // pred_fallthru
      _
    // Predicated region
    $region6: #{tpu_custom_call.1} parent=1 // pred_check
      _
    $region7: #{tpu_custom_call.1} parent=1 // pred_check_branch
      %21 = sbr.rel (0) target = $region9
    $region8: #{tpu_custom_call.1} parent=1 // pred_region
      %22 = dma.done [#allocation3], 64
    $region9: #{tpu_custom_call.1} parent=1 // pred_fallthru
      _
    %v23 = vld [vmem:[#allocation2] sm:$0x3]
    %v24 = vld [vmem:[#allocation2 + $0x2] sm:$0x3]
    %vm25 = vcmask 1041408
    %v26 = vsel %vm25, %v23, -inf
    %v27 = vrot.slane %v26, 4
    %v28 = vmax.f32 %v26, %v27
    %v29 = vrot.slane %v28, 2
    %v30 = vmax.f32 %v28, %v29
    %v31 = vrot.slane %v30, 1
    %v32 = vmax.f32 %v30, %v31
    %v33 = vsel %vm25, %v24, -inf
    %v34 = vrot.slane %v33, 4
    %v35 = vmax.f32 %v33, %v34
    %v36 = vrot.slane %v35, 2
    %v37 = vmax.f32 %v35, %v36
    %v38 = vrot.slane %v37, 1
    %v39 = vmax.f32 %v37, %v38
    %p40 = scmp.eq.s32.totalorder 0, 0
    // Predicated region
    $region10: #{tpu_custom_call.1} parent=1 // pred_check
      %p41 = pneg %p40
    $region11: #{tpu_custom_call.1} parent=1 // pred_check_branch
      %43 = sbr.rel (%p41) target = $region13
    $region12: #{tpu_custom_call.1} parent=1 // pred_region
      %vm46 = vcmask 1041409
      %v47 = vsel %vm46, %v39, %v32
      %49 = vst [vmem:[#allocation5] sm:$0x3] %v47
    $region13: #{tpu_custom_call.1} parent=1 // pred_fallthru
      _
    %p50 = scmp.ne.s32.totalorder 0, 0
    // Predicated region
    $region14: #{tpu_custom_call.1} parent=1 // pred_check
      %p51 = pneg %p50
    $region15: #{tpu_custom_call.1} parent=1 // pred_check_branch
      %53 = sbr.rel (%p51) target = $region17
    $region16: #{tpu_custom_call.1} parent=1 // pred_region
      %v54 = vld [vmem:[#allocation5] sm:$0x3]
      %vm57 = vcmask 1041409
      %v58 = vsel %vm57, %v39, %v32
      %v60 = vmax.f32 %v54, %v58
      %61 = vst [vmem:[#allocation5] sm:$0x3] %v60
    $region17: #{tpu_custom_call.1} parent=1 // pred_fallthru
      _
    // Predicated region
    $region18: #{tpu_custom_call.1} parent=1 // pred_check
      _
    $region19: #{tpu_custom_call.1} parent=1 // pred_check_branch
      %63 = sbr.rel (0) target = $region21
    $region20: #{tpu_custom_call.1} parent=1 // pred_region
      %s65 = ssub.s32 32, 32
      %66 = vsyncadd [#allocation4], %s65
      %s68 = sshll.u32 [#allocation5], 4
      %s69 = int_to_ptr.vmem [resolvable:$true] %s68
      %71 = dma.vmem_to_hbm [thread:$0]  %s69, 32, %s1, [#allocation4]
    $region21: #{tpu_custom_call.1} parent=1 // pred_fallthru
      _
    // Predicated region
    $region22: #{tpu_custom_call.1} parent=1 // pred_check
      _
    $region23: #{tpu_custom_call.1} parent=1 // pred_check_branch
      %73 = sbr.rel (0) target = $region25
    $region24: #{tpu_custom_call.1} parent=1 // pred_region
      %74 = dma.done [#allocation4], 32
    $region25: #{tpu_custom_call.1} parent=1 // pred_fallthru
      _
    %75 = vsyncpa [#allocation3], 1
    %76 = vsyncpa [#allocation4], 1

</llo_original>
